<compile_context>
chip_gen: v6e
topology: v6e:2x2x1
jax: 0.10.0
libtpu: 0.0.40
codegen_flags: <defaults>
</compile_context>

<pallas_src>
import functools

import jax
import jax.numpy as jnp
from jax.experimental import pallas as pl
from jax.experimental.pallas import tpu as pltpu


def _round_up(x, m):
    return (x + m - 1) // m * m


def _cdiv(a, b):
    return (a + b - 1) // b


def corr2d_kernel(w_ref, b_ref, xb_ref, xh_ref, o_ref, *, kh, kw, chunk_h):
    """2-D cross-correlation + bias for one row tile, register-blocked.

    w_ref : SMEM (kh*kw,)          flattened kernel taps (f32)
    b_ref : SMEM (1,)              bias (f32)
    xb_ref: VMEM (tile_h, ow_pad)  body rows of this tile (input dtype)
    xh_ref: VMEM (halo_h, ow_pad)  the rows directly below this tile
    o_ref : VMEM (tile_h, ow_pad)  lane-dense padded output tile
    """
    tile_h, ow_pad = o_ref.shape
    halo_h = xh_ref.shape[0]
    n_chunks = tile_h // chunk_h

    # Hoist every scalar SMEM read out of the loops.
    taps = [w_ref[i] for i in range(kh * kw)]
    bias = b_ref[0]

    for c in range(n_chunks):                       # static, modest unroll
        r0 = c * chunk_h                            # static, sublane-aligned

        # Load this chunk's input rows (plus its kh-1 halo rows) exactly once.
        if kh == 1:
            ext = xb_ref[pl.ds(r0, chunk_h), :].astype(jnp.float32)
        elif c + 1 < n_chunks:
            # Halo rows for this chunk still live inside the body block.
            ext = xb_ref[pl.ds(r0, chunk_h + halo_h), :].astype(jnp.float32)
        else:
            # Last chunk: its halo rows are the tile's halo block.
            ext = jnp.concatenate(
                [xb_ref[pl.ds(r0, chunk_h), :], xh_ref[...]],
                axis=0).astype(jnp.float32)

        # Accumulate all kh*kw taps in registers; one store per chunk.
        acc = jnp.zeros((chunk_h, ow_pad), jnp.float32)
        for a in range(kh):
            rows = ext[a:a + chunk_h, :]            # small in-register sublane shift
            for b in range(kw):
                if b == 0:
                    shifted = rows
                else:
                    # out[j] = rows[j + b]; wrapped lanes land only in the >= ow
                    # padding the wrapper discards (ow_pad >= ow + kw - 1).
                    shifted = pltpu.roll(rows, shift=ow_pad - b, axis=1)
                acc = acc + shifted * taps[a * kw + b]

        # Fused bias add; full-width unmasked lane-dense store.
        o_ref[pl.ds(r0, chunk_h), :] = (acc + bias).astype(o_ref.dtype)


def conv2d_forward(x, weight, bias, *, tile_h=None):
    """Pallas implementation of Conv2D.forward: corr2d(x, weight) + bias."""
    H, W = x.shape
    kh, kw = weight.shape
    oh, ow = H - kh + 1, W - kw + 1
    itemsize = jnp.dtype(x.dtype).itemsize

    # Lane-dense padded width: multiple of 128, with >= (kw-1) slack so the
    # rolled taps never wrap into valid lanes.
    ow_pad = _round_up(ow + kw - 1, 128)

    # Dtype-aware sublane quantum (packed sublane tiling: f32 8, bf16 16, i8 32).
    sub = max(8, 32 // itemsize)

    # Halo rows below each tile (sublane-aligned, >= kh - 1).
    halo_h = _round_up(max(kh - 1, 1), sub)

    # chunk_h: rows per register-resident accumulation chunk.  Keep the live
    # f32 working set (ext + acc + shifted ~= (3*chunk_h + halo_h) rows of
    # ow_pad lanes) well inside the 64 x 4 KiB vector register file.
    vreg_budget = 96 * 1024
    max_chunk = (vreg_budget // (4 * ow_pad) - halo_h) // 3
    chunk_h = max(halo_h, (min(64, max_chunk) // halo_h) * halo_h)

    # tile_h: rows per grid step.  The default keeps double-buffered blocks
    # within ~10 MiB so v5e's 16 MiB scoped-VMEM default (and v7x's 64 MiB
    # physical per TC) are never stressed, while staying large enough that the
    # ~0.35 us per-grid-step overhead is amortized.
    if tile_h is None:
        vmem_budget = 10 * 2 ** 20
        rows_fit = vmem_budget // (4 * ow_pad * itemsize)   # 2x in + 2x out bufs
        tile_h = min(1024, max(chunk_h, rows_fit // chunk_h * chunk_h))
    tile_h = min(tile_h, _round_up(oh, chunk_h))
    tile_h = max(chunk_h, _round_up(tile_h, chunk_h))
    assert tile_h % chunk_h == 0 and chunk_h % halo_h == 0

    num_tiles = _cdiv(oh, tile_h)
    oh_pad = num_tiles * tile_h
    ratio = tile_h // halo_h                       # tile_h is a multiple of halo_h

    # Zero-padded image (single HBM pass, layout plumbing only): rows cover the
    # padded output extent plus one halo block; lanes are 128-aligned.  Kept in
    # the input dtype; upcast happens per chunk inside the kernel.
    x_pad = jnp.zeros((oh_pad + halo_h, ow_pad), x.dtype).at[:H, :W].set(x)

    kernel = functools.partial(corr2d_kernel, kh=kh, kw=kw, chunk_h=chunk_h)

    in_bytes = 2 * (tile_h + halo_h) * ow_pad * itemsize     # double-buffered inputs
    out_bytes = 2 * tile_h * ow_pad * itemsize               # double-buffered output
    vmem_limit = int(min(32 * 2 ** 20, max(2 * (in_bytes + out_bytes), 16 * 2 ** 20)))

    out_pad = pl.pallas_call(
        kernel,
        out_shape=jax.ShapeDtypeStruct((oh_pad, ow_pad), x.dtype),
        grid=(num_tiles,),
        in_specs=[
            pl.BlockSpec(memory_space=pltpu.MemorySpace.SMEM),     # taps (kh*kw,)
            pl.BlockSpec(memory_space=pltpu.MemorySpace.SMEM),     # bias (1,)
            pl.BlockSpec((tile_h, ow_pad), lambda t: (t, 0)),      # body rows
            pl.BlockSpec((halo_h, ow_pad),
                         lambda t: ((t + 1) * ratio, 0)),          # halo rows below
        ],
        out_specs=pl.BlockSpec((tile_h, ow_pad), lambda t: (t, 0)),
        compiler_params=pltpu.CompilerParams(
            dimension_semantics=("parallel",),
            vmem_limit_bytes=vmem_limit),
    )(weight.reshape(-1).astype(jnp.float32),
      bias.astype(jnp.float32),
      x_pad, x_pad)

    # Module semantics require the exact (oh, ow) result; drop this slice if a
    # downstream consumer can take the padded slab (saves one output-side pass).
    return out_pad[:oh, :ow]


def corr2d_ref(x, k):
    """Pure-JAX reference matching the PyTorch corr2d math."""
    kh, kw = k.shape
    oh, ow = x.shape[0] - kh + 1, x.shape[1] - kw + 1
    out = jnp.zeros((oh, ow), jnp.float32)
    for a in range(kh):
        for b in range(kw):
            out = out + x[a:a + oh, b:b + ow].astype(jnp.float32) * k[a, b]
    return out


if __name__ == "__main__":
    key = jax.random.PRNGKey(0)
    k_x, k_w, k_x2, k_w2, k_x3, k_w3 = jax.random.split(key, 6)

    # --- Case 1: exact d2l shapes: X (6, 8), kernel_size (1, 2), bias (1,). ---
    H, W = 6, 8
    kernel_size = (1, 2)
    x = jax.random.normal(k_x, (H, W), dtype=jnp.float32)
    weight = jax.random.uniform(k_w, kernel_size, dtype=jnp.float32)
    bias = jnp.zeros((1,), dtype=jnp.float32)

    y = jax.block_until_ready(conv2d_forward(x, weight, bias))
    y_ref = corr2d_ref(x, weight) + bias[0]
    assert y.shape == (H - kernel_size[0] + 1, W - kernel_size[1] + 1)
    assert jnp.allclose(y, y_ref, atol=1e-5, rtol=1e-5)

    # Fixed kernel K = [[1, -1]] on the striped image, as in the d2l script.
    Xs = jnp.ones((6, 8), jnp.float32).at[:, 2:6].set(0.0)
    Ks = jnp.array([[1.0, -1.0]], jnp.float32)
    Ys = jax.block_until_ready(conv2d_forward(Xs, Ks, jnp.zeros((1,), jnp.float32)))
    assert jnp.allclose(Ys, corr2d_ref(Xs, Ks), atol=1e-5, rtol=1e-5)

    # --- Case 2: 3x3 kernel, multi-tile grid (row-halo block + lane roll). ---
    H2, W2 = 40, 200
    x2 = jax.random.normal(k_x2, (H2, W2), dtype=jnp.float32)
    w2 = jax.random.uniform(k_w2, (3, 3), dtype=jnp.float32)
    b2 = jnp.array([0.25], dtype=jnp.float32)
    y2 = jax.block_until_ready(conv2d_forward(x2, w2, b2, tile_h=24))
    y2_ref = corr2d_ref(x2, w2) + b2[0]
    assert y2.shape == (H2 - 2, W2 - 2)
    assert jnp.allclose(y2, y2_ref, atol=1e-4, rtol=1e-4)

    # --- Case 3: taller image, default tiling (multi-chunk register blocking). ---
    H3, W3 = 200, 130
    x3 = jax.random.normal(k_x3, (H3, W3), dtype=jnp.float32)
    w3 = jax.random.uniform(k_w3, (3, 3), dtype=jnp.float32)
    b3 = jnp.array([-0.5], dtype=jnp.float32)
    y3 = jax.block_until_ready(conv2d_forward(x3, w3, b3))
    y3_ref = corr2d_ref(x3, w3) + b3[0]
    assert y3.shape == (H3 - 2, W3 - 2)
    assert jnp.allclose(y3, y3_ref, atol=1e-4, rtol=1e-4)

    print("KERNEL_OK")
</pallas_src>

<mosaic_0001>
module attributes {stable_mosaic.version = 11 : i64} {
  func.func @corr2d_kernel(%arg0: i32, %arg1: memref<2xf32, #tpu.memory_space<smem>>, %arg2: memref<1xf32, #tpu.memory_space<smem>>, %arg3: memref<56x128xf32, #tpu.memory_space<vmem>>, %arg4: memref<8x128xf32, #tpu.memory_space<vmem>>, %arg5: memref<56x128xf32, #tpu.memory_space<vmem>>) attributes {dimension_semantics = [#tpu.dimension_semantics<parallel>], iteration_bounds = array<i64: 1>, scalar_prefetch = 0 : i64, scratch_operands = 0 : i64, tpu.core_type = #tpu.core_type<tc>, window_params = [{transform_indices = @transform_0, window_bounds = array<i64: 2>}, {transform_indices = @transform_1, window_bounds = array<i64: 1>}, {transform_indices = @transform_2, window_bounds = array<i64: 56, 128>}, {transform_indices = @transform_3, window_bounds = array<i64: 8, 128>}, {transform_indices = @transform_4, window_bounds = array<i64: 56, 128>}]} {
    %c0 = arith.constant 0 : index
    %0 = memref.load %arg1[%c0] : memref<2xf32, #tpu.memory_space<smem>>
    %c1 = arith.constant 1 : index
    %1 = memref.load %arg1[%c1] : memref<2xf32, #tpu.memory_space<smem>>
    %c0_0 = arith.constant 0 : index
    %2 = memref.load %arg2[%c0_0] : memref<1xf32, #tpu.memory_space<smem>>
    %c0_1 = arith.constant 0 : index
    %c0_2 = arith.constant 0 : index
    %3 = vector.load %arg3[%c0_1, %c0_2] : memref<56x128xf32, #tpu.memory_space<vmem>>, vector<56x128xf32>
    %cst = arith.constant 0.000000e+00 : f32
    %4 = vector.broadcast %cst : f32 to vector<56x128xf32>
    %5 = vector.broadcast %0 : f32 to vector<56x128xf32>
    %6 = arith.mulf %3, %5 : vector<56x128xf32>
    %7 = arith.addf %4, %6 : vector<56x128xf32>
    %c127_i32 = arith.constant 127 : i32
    %8 = tpu.dynamic_rotate %3 by %c127_i32 dim 1 : vector<56x128xf32>, i32 -> vector<56x128xf32>
    %9 = vector.broadcast %1 : f32 to vector<56x128xf32>
    %10 = arith.mulf %8, %9 : vector<56x128xf32>
    %11 = arith.addf %7, %10 : vector<56x128xf32>
    %12 = vector.broadcast %2 : f32 to vector<56x128xf32>
    %13 = arith.addf %11, %12 : vector<56x128xf32>
    %c0_3 = arith.constant 0 : index
    %c0_4 = arith.constant 0 : index
    %14 = vector.load %arg5[%c0_3, %c0_4] : memref<56x128xf32, #tpu.memory_space<vmem>>, vector<56x128xf32>
    tpu.vector_store %arg5[%c0_3, %c0_4], %13 {strides = array<i32>} : memref<56x128xf32, #tpu.memory_space<vmem>>, vector<56x128xf32>,
    return
  }
  func.func @transform_0(%arg0: i32) -> i32 {
    %c0_i32 = arith.constant 0 : i32
    %c0_i32_0 = arith.constant 0 : i32
    return %c0_i32 : i32
  }
  func.func @transform_1(%arg0: i32) -> i32 {
    %c0_i32 = arith.constant 0 : i32
    %c0_i32_0 = arith.constant 0 : i32
    return %c0_i32 : i32
  }
  func.func @transform_2(%arg0: i32) -> (i32, i32) {
    %c0_i32 = arith.constant 0 : i32
    %c0_i32_0 = arith.constant 0 : i32
    return %arg0, %c0_i32 : i32, i32
  }
  func.func @transform_3(%arg0: i32) -> (i32, i32) {
    %c1_i32 = arith.constant 1 : i32
    %0 = arith.addi %arg0, %c1_i32 : i32
    %c7_i32 = arith.constant 7 : i32
    %1 = arith.muli %0, %c7_i32 : i32
    %c0_i32 = arith.constant 0 : i32
    %c0_i32_0 = arith.constant 0 : i32
    return %1, %c0_i32 : i32, i32
  }
  func.func @transform_4(%arg0: i32) -> (i32, i32) {
    %c0_i32 = arith.constant 0 : i32
    %c0_i32_0 = arith.constant 0 : i32
    return %arg0, %c0_i32 : i32, i32
  }
}

</mosaic_0001>

<llo_original>
// kernel: tpu_custom_call.1
$region0: #{tpu_custom_call.1}
  #allocation0 [shape = 'u32[]', space=smem, size = 0x4, offset = 0x4, fixed_abs, tag = 'smem constant byte address 0x4 - core index']
  #allocation1 [shape = 'u32[144,128]{1,0:T(1,128)}', space=vmem, size = 0x12000, scoped, tag = 'internal scratch']
  #allocation2 [shape = 'f32[1]{0:T(128)S(6)}', space=smem, size = 0x200, scoped, tag = 'scoped memory for tpu_custom_call.1']
  %s0 = inlined_call_operand.vmem [shape: f32[2], index: 0, kind: input, shape index: {}]
  %s1 = inlined_call_operand.<no memory space> [shape: f32[1], index: 1, kind: input, shape index: {}]
  %s2 = inlined_call_operand.hbm [shape: f32[64,128], index: 2, kind: input, shape index: {}]
  %s3 = inlined_call_operand.hbm [shape: f32[64,128], index: 3, kind: input, shape index: {}]
  %s4 = inlined_call_operand.hbm [shape: f32[56,128], index: 4, kind: output, shape index: {}]
  %s5 = sld [smem:[#allocation0]]
  $region38: #{tpu_custom_call.1} parent=0
    _
  %s7 = ssub.s32 1, %s5
  %s8 = scalar_select 0, %s7, %s5
  %9 = sst [smem:[#allocation2]] %s1
  $region1: #{tpu_custom_call.1} parent=0
    #allocation3 [shape = 'u8[512]{0}', space=smem, size = 0x200, scoped, tag = 'input window, operand 0, single buffered']
    #allocation4 [shape = 's32[1]{0}', space=sflag, size = 0x4, scoped, tag = 'scoped memory for tpu_custom_call.1']
    #allocation5 [shape = 's32[1]{0}', space=sflag, size = 0x4, scoped, tag = 'scoped memory for tpu_custom_call.1']
    #allocation6 [shape = 's32[1]{0}', space=sflag, size = 0x4, scoped, tag = 'scoped memory for tpu_custom_call.1']
    #allocation7 [shape = 'u8[28672]{0}', space=vmem, size = 0x7000, scoped, tag = 'input window, operand 2, single buffered']
    #allocation8 [shape = 'u8[4096]{0}', space=vmem, size = 0x1000, scoped, tag = 'input window, operand 3, single buffered']
    #allocation9 [shape = 's32[1]{0}', space=sflag, size = 0x4, scoped, tag = 'scoped memory for tpu_custom_call.1']
    #allocation10 [shape = 'u8[28672]{0}', space=vmem, size = 0x7000, scoped, tag = 'output window, operand 0, single buffered']
    %10 = vsyncpa [#allocation6], 0
    %11 = vsyncpa [#allocation4], 0
    %12 = vsyncpa [#allocation9], 0
    %13 = vsyncpa [#allocation5], 0
    // Predicated region
    $region2: #{tpu_custom_call.1} parent=1 // pred_check
      _
    $region3: #{tpu_custom_call.1} parent=1 // pred_check_branch
      %15 = sbr.rel (0) target = $region5
    $region4: #{tpu_custom_call.1} parent=1 // pred_region
      %s17 = ssub.s32 16, 16
      %18 = vsyncadd [#allocation6], %s17
      %s20 = sshll.u32 %s0, 4
      %s21 = int_to_ptr.vmem [resolvable:$true] %s20
      %23 = dma.vmem_to_smem %s21, 16, [#allocation3], [#allocation6]
    $region5: #{tpu_custom_call.1} parent=1 // pred_fallthru
      _
    // Predicated region
    $region6: #{tpu_custom_call.1} parent=1 // pred_check
      _
    $region7: #{tpu_custom_call.1} parent=1 // pred_check_branch
      %25 = sbr.rel (0) target = $region9
    $region8: #{tpu_custom_call.1} parent=1 // pred_region
      _
    $region9: #{tpu_custom_call.1} parent=1 // pred_fallthru
      _
    // Predicated region
    $region10: #{tpu_custom_call.1} parent=1 // pred_check
      _
    $region11: #{tpu_custom_call.1} parent=1 // pred_check_branch
      %27 = sbr.rel (0) target = $region13
    $region12: #{tpu_custom_call.1} parent=1 // pred_region
      %s29 = ssub.s32 896, 896
      %30 = vsyncadd [#allocation4], %s29
      %s31 = sshll.u32 [#allocation7], 4
      %s32 = int_to_ptr.vmem [resolvable:$true] %s31
      %37 = dma.hbm_to_vmem [thread:$0]  %s2, 896, %s32, [#allocation4], 128, 128, 8
    $region13: #{tpu_custom_call.1} parent=1 // pred_fallthru
      _
    // Predicated region
    $region14: #{tpu_custom_call.1} parent=1 // pred_check
      _
    $region15: #{tpu_custom_call.1} parent=1 // pred_check_branch
      %39 = sbr.rel (0) target = $region17
    $region16: #{tpu_custom_call.1} parent=1 // pred_region
      %s40 = sadd.s32 0, 1
      %s41 = smul.u32 %s40, 7
      %s43 = ssub.s32 128, 128
      %44 = vsyncadd [#allocation9], %s43
      %s45 = smul.addr %s41, 128
      %s46 = scalar_lea.hbm %s3, %s45
      %s48 = sshll.u32 [#allocation8], 4
      %s49 = int_to_ptr.vmem [resolvable:$true] %s48
      %51 = dma.hbm_to_vmem [thread:$0]  %s46, 128, %s49, [#allocation9]
    $region17: #{tpu_custom_call.1} parent=1 // pred_fallthru
      _
    // Predicated region
    $region18: #{tpu_custom_call.1} parent=1 // pred_check
      _
    $region19: #{tpu_custom_call.1} parent=1 // pred_check_branch
      %53 = sbr.rel (0) target = $region21
    $region20: #{tpu_custom_call.1} parent=1 // pred_region
      %54 = dma.done [#allocation6], 16
    $region21: #{tpu_custom_call.1} parent=1 // pred_fallthru
      _
    // Predicated region
    $region22: #{tpu_custom_call.1} parent=1 // pred_check
      _
    $region23: #{tpu_custom_call.1} parent=1 // pred_check_branch
      %56 = sbr.rel (0) target = $region25
    $region24: #{tpu_custom_call.1} parent=1 // pred_region
      %57 = dma.done [#allocation4], 896
    $region25: #{tpu_custom_call.1} parent=1 // pred_fallthru
      _
    // Predicated region
    $region26: #{tpu_custom_call.1} parent=1 // pred_check
      _
    $region27: #{tpu_custom_call.1} parent=1 // pred_check_branch
      %59 = sbr.rel (0) target = $region29
    $region28: #{tpu_custom_call.1} parent=1 // pred_region
      %60 = dma.done [#allocation9], 128
    $region29: #{tpu_custom_call.1} parent=1 // pred_fallthru
      _
    %61 = sfence
    %s62 = sadd.s32 0, 1
    %s63 = smul.u32 %s62, 7
    %s64 = sld [smem:[#allocation3]]
    %s65 = sld [smem:[#allocation3 + $0x1]]
    %s66 = sld [smem:[#allocation2]]
    %v67 = vld [vmem:[#allocation7] sm:$0xff]
    %v68 = vld [vmem:[#allocation7 + $0x8] sm:$0xff]
    %v69 = vld [vmem:[#allocation7 + $0x10] sm:$0xff]
    %v70 = vld [vmem:[#allocation7 + $0x18] sm:$0xff]
    %v71 = vld [vmem:[#allocation7 + $0x20] sm:$0xff]
    %v72 = vld [vmem:[#allocation7 + $0x28] sm:$0xff]
    %v73 = vld [vmem:[#allocation7 + $0x30] sm:$0xff]
    %v74 = vstv %s64
    %v75 = vmul.f32 %v67, %v74
    %v76 = vmul.f32 %v68, %v74
    %v77 = vmul.f32 %v69, %v74
    %v78 = vmul.f32 %v70, %v74
    %v79 = vmul.f32 %v71, %v74
    %v80 = vmul.f32 %v72, %v74
    %v81 = vmul.f32 %v73, %v74
    %v82 = vadd.f32 %v75, 0.0
    %v83 = vadd.f32 %v76, 0.0
    %v84 = vadd.f32 %v77, 0.0
    %v85 = vadd.f32 %v78, 0.0
    %v86 = vadd.f32 %v79, 0.0
    %v87 = vadd.f32 %v80, 0.0
    %v88 = vadd.f32 %v81, 0.0
    %89 = vrot.lane.b32.xlu0 %v67, 127
    %v90 = vpop.permute.xlu0 %89
    %91 = vrot.lane.b32.xlu0 %v68, 127
    %v92 = vpop.permute.xlu0 %91
    %93 = vrot.lane.b32.xlu0 %v69, 127
    %v94 = vpop.permute.xlu0 %93
    %95 = vrot.lane.b32.xlu0 %v70, 127
    %v96 = vpop.permute.xlu0 %95
    %97 = vrot.lane.b32.xlu0 %v71, 127
    %v98 = vpop.permute.xlu0 %97
    %99 = vrot.lane.b32.xlu0 %v72, 127
    %v100 = vpop.permute.xlu0 %99
    %101 = vrot.lane.b32.xlu0 %v73, 127
    %v102 = vpop.permute.xlu0 %101
    %v103 = vstv %s65
    %v104 = vmul.f32 %v90, %v103
    %v105 = vmul.f32 %v92, %v103
    %v106 = vmul.f32 %v94, %v103
    %v107 = vmul.f32 %v96, %v103
    %v108 = vmul.f32 %v98, %v103
    %v109 = vmul.f32 %v100, %v103
    %v110 = vmul.f32 %v102, %v103
    %v111 = vadd.f32 %v82, %v104
    %v112 = vadd.f32 %v83, %v105
    %v113 = vadd.f32 %v84, %v106
    %v114 = vadd.f32 %v85, %v107
    %v115 = vadd.f32 %v86, %v108
    %v116 = vadd.f32 %v87, %v109
    %v117 = vadd.f32 %v88, %v110
    %v118 = vstv %s66
    %v119 = vadd.f32 %v111, %v118
    %v120 = vadd.f32 %v112, %v118
    %v121 = vadd.f32 %v113, %v118
    %v122 = vadd.f32 %v114, %v118
    %v123 = vadd.f32 %v115, %v118
    %v124 = vadd.f32 %v116, %v118
    %v125 = vadd.f32 %v117, %v118
    %126 = vst [vmem:[#allocation10] sm:$0xff] %v119
    %127 = vst [vmem:[#allocation10 + $0x8] sm:$0xff] %v120
    %128 = vst [vmem:[#allocation10 + $0x10] sm:$0xff] %v121
    %129 = vst [vmem:[#allocation10 + $0x18] sm:$0xff] %v122
    %130 = vst [vmem:[#allocation10 + $0x20] sm:$0xff] %v123
    %131 = vst [vmem:[#allocation10 + $0x28] sm:$0xff] %v124
    %132 = vst [vmem:[#allocation10 + $0x30] sm:$0xff] %v125
    // Predicated region
    $region30: #{tpu_custom_call.1} parent=1 // pred_check
      _
    $region31: #{tpu_custom_call.1} parent=1 // pred_check_branch
      %134 = sbr.rel (0) target = $region33
    $region32: #{tpu_custom_call.1} parent=1 // pred_region
      %s136 = ssub.s32 896, 896
      %137 = vsyncadd [#allocation5], %s136
      %s138 = sshll.u32 [#allocation10], 4
      %s139 = int_to_ptr.vmem [resolvable:$true] %s138
      %144 = dma.vmem_to_hbm [thread:$0]  %s139, 896, %s4, [#allocation5], 128, 128, 8
    $region33: #{tpu_custom_call.1} parent=1 // pred_fallthru
      _
    // Predicated region
    $region34: #{tpu_custom_call.1} parent=1 // pred_check
      _
    $region35: #{tpu_custom_call.1} parent=1 // pred_check_branch
      %146 = sbr.rel (0) target = $region37
    $region36: #{tpu_custom_call.1} parent=1 // pred_region
      %147 = dma.done [#allocation5], 896
    $region37: #{tpu_custom_call.1} parent=1 // pred_fallthru
      _
    %148 = vsyncpa [#allocation4], 1
    %149 = vsyncpa [#allocation9], 1
    %150 = vsyncpa [#allocation5], 1
    %151 = vsyncpa [#allocation6], 1

</llo_original>
